<compile_context>
chip_gen: v5e
topology: v5e:2x2
jax: 0.10.0
libtpu: 0.0.40
codegen_flags: <defaults>
</compile_context>

<pallas_src>
import functools
import math

import jax
import jax.numpy as jnp
from jax.experimental import pallas as pl
from jax.experimental.pallas import tpu as pltpu

EPS_GIN = 0.0
EPS_BN = 1e-5
LANE = 128
MIB = 1 << 20


def _round_up(x, m):
    return ((x + m - 1) // m) * m


def _pad2(a, rows, cols, fill=0.0):
    out = jnp.full((rows, cols), fill, a.dtype)
    return out.at[: a.shape[0], : a.shape[1]].set(a)


def gin_kernel(a_ref, x_ref,
               w1_ref, b1_ref, w2_ref, b2_ref,
               wl1_ref, bl1_ref, wl2_ref, bl2_ref,
               logits_ref,
               acc_ref, *, tk, x_resident):
    k = pl.program_id(1)

    @pl.when(k == 0)
    def _():
        acc_ref[...] = jnp.zeros_like(acc_ref)

    # Streaming GIN aggregation: (1+eps)*x_i + sum_j x_j (self term folded
    # into A's diagonal).  bf16 operands on the MXU, f32 accumulation.
    if x_resident:
        off = pl.multiple_of(k * tk, tk)
        xb = x_ref[pl.ds(off, tk), :]          # slice the VMEM-resident x
    else:
        xb = x_ref[...]                        # streamed (tk, Fp) block
    acc_ref[...] += jnp.dot(a_ref[...], xb, preferred_element_type=jnp.float32)

    # MLP epilogue only on the last reduction step.
    @pl.when(k == pl.num_programs(1) - 1)
    def _():
        h0 = acc_ref[...]
        # GINConv MLP: Linear (+ folded eval BatchNorm) -> ReLU -> Linear -> ReLU
        z1 = jnp.dot(h0, w1_ref[...], preferred_element_type=jnp.float32) + b1_ref[...]
        h1 = jnp.maximum(z1, 0.0)
        z2 = jnp.dot(h1, w2_ref[...], preferred_element_type=jnp.float32) + b2_ref[...]
        h1 = jnp.maximum(z2, 0.0)
        # lin1 + ReLU (dropout p=0.5 is identity in eval mode)
        z3 = jnp.dot(h1, wl1_ref[...], preferred_element_type=jnp.float32) + bl1_ref[...]
        hh = jnp.maximum(z3, 0.0)
        # lin2 -> raw logits (log_softmax happens in the wrapper on (N, C))
        logits_ref[...] = (jnp.dot(hh, wl2_ref[...],
                                   preferred_element_type=jnp.float32)
                           + bl2_ref[...])


def gin_forward(x, edge_index, params, *, tm=512, tk=1024):
    """x: (N, F) float32, edge_index: (2, E) int32 with row0=src, row1=dst."""
    n, f = x.shape
    h = params["w1"].shape[1]
    h3 = params["wl1"].shape[1]
    c = params["wl2"].shape[1]

    f_pad = _round_up(max(f, 1), LANE)
    h_pad = _round_up(h, LANE)
    h3_pad = _round_up(h3, LANE)
    c_pad = _round_up(c, LANE)

    # --- tile selection --------------------------------------------------
    if n <= 1024:
        # Small-graph fast path: one (1,1) grid block, no padding beyond 128.
        n_pad = _round_up(n, LANE)
        tm_, tk_ = n_pad, n_pad
    else:
        tm_, tk_ = tm, tk
        n_pad = _round_up(n, math.lcm(tm_, tk_))   # keeps n_pad//tm_ even (v7x 2-TC)

    # Keep x fully VMEM-resident unless it would blow the budget
    # (bf16 x is 256 B/row at f_pad=128, so this covers ~32K nodes).
    x_bytes = n_pad * f_pad * 2
    x_resident = x_bytes <= 8 * MIB

    # --- glue: dense adjacency built directly in bf16 (dst <- src), self
    #     term folded into the diagonal.  Exact for edge counts <= 256. -----
    src = edge_index[0].astype(jnp.int32)
    dst = edge_index[1].astype(jnp.int32)
    adj = jnp.zeros((n_pad, n_pad), jnp.bfloat16)
    adj = adj.at[dst, src].add(jnp.ones_like(src, dtype=jnp.bfloat16))
    idx = jnp.arange(n)
    adj = adj.at[idx, idx].add(jnp.bfloat16(1.0 + EPS_GIN))

    x_pad = _pad2(x, n_pad, f_pad).astype(jnp.bfloat16)

    # --- fold eval-mode BatchNorm into the first Linear -------------------
    scale = params["bn_gamma"] * jax.lax.rsqrt(params["bn_var"] + EPS_BN)
    w1f = params["w1"] * scale
    b1f = (params["b1"] - params["bn_mean"]) * scale + params["bn_beta"]

    # --- pad weights to 128-lane multiples (results unchanged) ------------
    w1p = _pad2(w1f, f_pad, h_pad)
    b1p = _pad2(b1f, 1, h_pad)
    w2p = _pad2(params["w2"], h_pad, h_pad)
    b2p = _pad2(params["b2"], 1, h_pad)
    wl1p = _pad2(params["wl1"], h_pad, h3_pad)
    bl1p = _pad2(params["bl1"], 1, h3_pad)
    wl2p = _pad2(params["wl2"], h3_pad, c_pad)
    bl2p = _pad2(params["bl2"], 1, c_pad)

    grid = (n_pad // tm_, n_pad // tk_)

    def _wspec(shape):
        return pl.BlockSpec(shape, lambda i, k: (0, 0))   # grid-invariant, stays resident

    if x_resident:
        x_spec = pl.BlockSpec((n_pad, f_pad), lambda i, k: (0, 0))  # loaded once
    else:
        x_spec = pl.BlockSpec((tk_, f_pad), lambda i, k: (k, 0))    # streamed per k

    in_specs = [
        pl.BlockSpec((tm_, tk_), lambda i, k: (i, k)),     # A block (streams)
        x_spec,                                            # x
        _wspec((f_pad, h_pad)), _wspec((1, h_pad)),        # w1, b1 (BN folded)
        _wspec((h_pad, h_pad)), _wspec((1, h_pad)),        # w2, b2
        _wspec((h_pad, h3_pad)), _wspec((1, h3_pad)),      # wl1, bl1
        _wspec((h3_pad, c_pad)), _wspec((1, c_pad)),       # wl2, bl2
    ]
    out_specs = pl.BlockSpec((tm_, c_pad), lambda i, k: (i, 0))      # logits (lane-dense)
    out_shape = jax.ShapeDtypeStruct((n_pad, c_pad), jnp.float32)

    # --- VMEM budget / compiler limit (clamped for v7x's 64 MiB physical) --
    weight_bytes = 4 * (f_pad * h_pad + h_pad * h_pad + h_pad * h3_pad
                        + h3_pad * c_pad + 2 * h_pad + h3_pad + c_pad)
    a_blk_bytes = tm_ * tk_ * 2
    x_blk_bytes = x_bytes if x_resident else tk_ * f_pad * 2
    out_blk_bytes = tm_ * c_pad * 4
    acc_bytes = tm_ * f_pad * 4
    vmem_need = (2 * a_blk_bytes + 2 * x_blk_bytes + 2 * weight_bytes
                 + 2 * out_blk_bytes + acc_bytes)
    vmem_limit = int(min(max(int(vmem_need * 1.25) + 2 * MIB, 32 * MIB), 48 * MIB))

    # --- honest cost estimate (A once; x once if resident, else per row block)
    x_passes = 1 if x_resident else (n_pad // tm_)
    flops = (2 * n_pad * n_pad * f_pad
             + 2 * n_pad * (f_pad * h_pad + h_pad * h_pad
                            + h_pad * h3_pad + h3_pad * c_pad))
    bytes_accessed = (2 * n_pad * n_pad                  # bf16 adjacency
                      + 2 * n_pad * f_pad * x_passes     # bf16 features
                      + weight_bytes
                      + 4 * n_pad * c_pad)               # single f32 logits output
    cost = pl.CostEstimate(flops=int(flops), transcendentals=0,
                           bytes_accessed=int(bytes_accessed))

    kernel = functools.partial(gin_kernel, tk=tk_, x_resident=x_resident)

    logits_pad = pl.pallas_call(
        kernel,
        out_shape=out_shape,
        grid_spec=pltpu.PrefetchScalarGridSpec(
            num_scalar_prefetch=0,
            grid=grid,
            in_specs=in_specs,
            out_specs=out_specs,
            scratch_shapes=[pltpu.VMEM((tm_, f_pad), jnp.float32)],
        ),
        compiler_params=pltpu.CompilerParams(
            dimension_semantics=("parallel", "arbitrary"),
            vmem_limit_bytes=vmem_limit),
        cost_estimate=cost,
    )(adj, x_pad, w1p, b1p, w2p, b2p, wl1p, bl1p, wl2p, bl2p)

    logits = logits_pad[:n, :c]
    log_probs = jax.nn.log_softmax(logits, axis=1)   # tiny (N, C) op in the wrapper
    return log_probs, logits


def gin_reference(x, edge_index, params):
    """Pure-JAX eval-mode reference (mirrors the kernel's bf16 aggregation)."""
    n = x.shape[0]
    src, dst = edge_index[0], edge_index[1]
    adj = jnp.zeros((n, n), jnp.float32).at[dst, src].add(1.0)
    adj = adj.at[jnp.arange(n), jnp.arange(n)].add(1.0 + EPS_GIN)
    hp = jax.lax.Precision.HIGHEST
    h0 = jnp.dot(adj.astype(jnp.bfloat16).astype(jnp.float32),
                 x.astype(jnp.bfloat16).astype(jnp.float32), precision=hp)
    z1 = jnp.dot(h0, params["w1"], precision=hp) + params["b1"]
    bn = (z1 - params["bn_mean"]) * jax.lax.rsqrt(params["bn_var"] + EPS_BN)
    bn = bn * params["bn_gamma"] + params["bn_beta"]
    h1 = jnp.maximum(bn, 0.0)
    h1 = jnp.maximum(jnp.dot(h1, params["w2"], precision=hp) + params["b2"], 0.0)
    hh = jnp.maximum(jnp.dot(h1, params["wl1"], precision=hp) + params["bl1"], 0.0)
    logits = jnp.dot(hh, params["wl2"], precision=hp) + params["bl2"]
    return jax.nn.log_softmax(logits, axis=1), logits


def init_params(key, num_node_features, dim_h, num_classes):
    """Deterministic init mimicking PyTorch Linear (U(-1/sqrt(fan_in), +))."""
    def linear(k, fan_in, fan_out):
        kw, kb = jax.random.split(k)
        bound = 1.0 / jnp.sqrt(float(fan_in))
        w = jax.random.uniform(kw, (fan_in, fan_out), jnp.float32, -bound, bound)
        b = jax.random.uniform(kb, (1, fan_out), jnp.float32, -bound, bound)
        return w, b

    k1, k2, k3, k4 = jax.random.split(key, 4)
    w1, b1 = linear(k1, num_node_features, dim_h)
    w2, b2 = linear(k2, dim_h, dim_h)
    wl1, bl1 = linear(k3, dim_h, dim_h * 3)
    wl2, bl2 = linear(k4, dim_h * 3, num_classes)
    return dict(
        w1=w1, b1=b1,
        bn_gamma=jnp.ones((1, dim_h), jnp.float32),
        bn_beta=jnp.zeros((1, dim_h), jnp.float32),
        bn_mean=jnp.zeros((1, dim_h), jnp.float32),   # fresh running stats
        bn_var=jnp.ones((1, dim_h), jnp.float32),
        w2=w2, b2=b2,
        wl1=wl1, bl1=bl1,
        wl2=wl2, bl2=bl2,
    )


if __name__ == "__main__":
    key = jax.random.PRNGKey(0)
    k_x, k_e, k_p = jax.random.split(key, 3)

    num_nodes = 16
    num_edges = 32
    num_node_features = 4
    dim_h = 32
    num_classes = 2     # feature_type == 'discrete'

    x = jax.random.normal(k_x, (num_nodes, num_node_features), jnp.float32)
    edge_index = jax.random.randint(k_e, (2, num_edges), 0, num_nodes, jnp.int32)

    params = init_params(k_p, num_node_features, dim_h, num_classes)

    log_probs, logits = gin_forward(x, edge_index, params)
    jax.block_until_ready((log_probs, logits))

    assert log_probs.shape == (num_nodes, num_classes)
    assert logits.shape == (num_nodes, num_classes)
    # log_softmax rows must exponentiate-sum to 1
    assert jnp.allclose(jnp.sum(jnp.exp(log_probs), axis=1), 1.0, atol=1e-5)

    # Verify against the pure-JAX eval-mode reference.
    ref_log_probs, ref_logits = gin_reference(x, edge_index, params)
    assert jnp.allclose(logits, ref_logits, atol=2e-3, rtol=2e-3)
    assert jnp.allclose(log_probs, ref_log_probs, atol=2e-3, rtol=2e-3)

    print("KERNEL_OK")
</pallas_src>

<mosaic_0001>
module attributes {stable_mosaic.version = 11 : i64} {
  func.func @gin_kernel(%arg0: i32, %arg1: i32, %arg2: memref<128x128xbf16, #tpu.memory_space<vmem>>, %arg3: memref<128x128xbf16, #tpu.memory_space<vmem>>, %arg4: memref<128x128xf32, #tpu.memory_space<vmem>>, %arg5: memref<1x128xf32, #tpu.memory_space<vmem>>, %arg6: memref<128x128xf32, #tpu.memory_space<vmem>>, %arg7: memref<1x128xf32, #tpu.memory_space<vmem>>, %arg8: memref<128x128xf32, #tpu.memory_space<vmem>>, %arg9: memref<1x128xf32, #tpu.memory_space<vmem>>, %arg10: memref<128x128xf32, #tpu.memory_space<vmem>>, %arg11: memref<1x128xf32, #tpu.memory_space<vmem>>, %arg12: memref<128x128xf32, #tpu.memory_space<vmem>>, %arg13: memref<128x128xf32, #tpu.memory_space<vmem>>) attributes {dimension_semantics = [#tpu.dimension_semantics<parallel>, #tpu.dimension_semantics<arbitrary>], iteration_bounds = array<i64: 1, 1>, scalar_prefetch = 0 : i64, scratch_operands = 1 : i64, tpu.core_type = #tpu.core_type<tc>, window_params = [{transform_indices = @transform_0, window_bounds = array<i64: 128, 128>}, {pipeline_mode = #tpu.pipeline_mode<synchronous>, transform_indices = @transform_1, window_bounds = array<i64: 128, 128>}, {pipeline_mode = #tpu.pipeline_mode<synchronous>, transform_indices = @transform_2, window_bounds = array<i64: 128, 128>}, {pipeline_mode = #tpu.pipeline_mode<synchronous>, transform_indices = @transform_3, window_bounds = array<i64: 1, 128>}, {pipeline_mode = #tpu.pipeline_mode<synchronous>, transform_indices = @transform_4, window_bounds = array<i64: 128, 128>}, {pipeline_mode = #tpu.pipeline_mode<synchronous>, transform_indices = @transform_5, window_bounds = array<i64: 1, 128>}, {pipeline_mode = #tpu.pipeline_mode<synchronous>, transform_indices = @transform_6, window_bounds = array<i64: 128, 128>}, {pipeline_mode = #tpu.pipeline_mode<synchronous>, transform_indices = @transform_7, window_bounds = array<i64: 1, 128>}, {pipeline_mode = #tpu.pipeline_mode<synchronous>, transform_indices = @transform_8, window_bounds = array<i64: 128, 128>}, {pipeline_mode = #tpu.pipeline_mode<synchronous>, transform_indices = @transform_9, window_bounds = array<i64: 1, 128>}, {transform_indices = @transform_10, window_bounds = array<i64: 128, 128>}]} {
    %c0_i32 = arith.constant 0 : i32
    %0 = arith.cmpi eq, %arg1, %c0_i32 : i32
    %1 = arith.extui %0 : i1 to i32
    %c0_i32_0 = arith.constant 0 : i32
    %2 = arith.cmpi ne, %1, %c0_i32_0 : i32
    scf.if %2 {
      %cst_9 = arith.constant 0.000000e+00 : f32
      %15 = vector.broadcast %cst_9 : f32 to vector<128x128xf32>
      %c0_10 = arith.constant 0 : index
      %c0_11 = arith.constant 0 : index
      %16 = vector.load %arg13[%c0_10, %c0_11] : memref<128x128xf32, #tpu.memory_space<vmem>>, vector<128x128xf32>
      tpu.vector_store %arg13[%c0_10, %c0_11], %15 {strides = array<i32>} : memref<128x128xf32, #tpu.memory_space<vmem>>, vector<128x128xf32>,
    } else {
    }
    %c128_i32 = arith.constant 128 : i32
    %3 = arith.muli %arg1, %c128_i32 : i32
    %4 = tpu.assume_multiple %3, 128 : i32
    %5 = arith.index_cast %4 : i32 to index
    %c0 = arith.constant 0 : index
    %6 = vector.load %arg3[%5, %c0] : memref<128x128xbf16, #tpu.memory_space<vmem>>, vector<128x128xbf16>
    %c0_1 = arith.constant 0 : index
    %c0_2 = arith.constant 0 : index
    %7 = vector.load %arg13[%c0_1, %c0_2] : memref<128x128xf32, #tpu.memory_space<vmem>>, vector<128x128xf32>
    %c0_3 = arith.constant 0 : index
    %c0_4 = arith.constant 0 : index
    %8 = vector.load %arg2[%c0_3, %c0_4] : memref<128x128xbf16, #tpu.memory_space<vmem>>, vector<128x128xbf16>
    %cst = arith.constant dense<0.000000e+00> : vector<128x128xf32>
    %9 = tpu.matmul %8, %6, %cst {dimension_numbers = #tpu.dot_dimension_numbers<[1], [0], [0], [1], [0, 0, 1, 1], [], []>} : vector<128x128xbf16>, vector<128x128xbf16>, vector<128x128xf32> -> vector<128x128xf32>
    %10 = arith.addf %7, %9 : vector<128x128xf32>
    %c0_5 = arith.constant 0 : index
    %c0_6 = arith.constant 0 : index
    %11 = vector.load %arg13[%c0_5, %c0_6] : memref<128x128xf32, #tpu.memory_space<vmem>>, vector<128x128xf32>
    tpu.vector_store %arg13[%c0_5, %c0_6], %10 {strides = array<i32>} : memref<128x128xf32, #tpu.memory_space<vmem>>, vector<128x128xf32>,
    %c0_i32_7 = arith.constant 0 : i32
    %12 = arith.cmpi eq, %arg1, %c0_i32_7 : i32
    %13 = arith.extui %12 : i1 to i32
    %c0_i32_8 = arith.constant 0 : i32
    %14 = arith.cmpi ne, %13, %c0_i32_8 : i32
    scf.if %14 {
      %c0_9 = arith.constant 0 : index
      %c0_10 = arith.constant 0 : index
      %15 = vector.load %arg13[%c0_9, %c0_10] : memref<128x128xf32, #tpu.memory_space<vmem>>, vector<128x128xf32>
      %c0_11 = arith.constant 0 : index
      %c0_12 = arith.constant 0 : index
      %16 = vector.load %arg4[%c0_11, %c0_12] : memref<128x128xf32, #tpu.memory_space<vmem>>, vector<128x128xf32>
      %cst_13 = arith.constant dense<0.000000e+00> : vector<128x128xf32>
      %17 = tpu.matmul %15, %16, %cst_13 {dimension_numbers = #tpu.dot_dimension_numbers<[1], [0], [0], [1], [0, 0, 1, 1], [], []>} : vector<128x128xf32>, vector<128x128xf32>, vector<128x128xf32> -> vector<128x128xf32>
      %c0_14 = arith.constant 0 : index
      %c0_15 = arith.constant 0 : index
      %18 = vector.load %arg5[%c0_14, %c0_15] : memref<1x128xf32, #tpu.memory_space<vmem>>, vector<1x128xf32>
      %19 = vector.broadcast %18 : vector<1x128xf32> to vector<128x128xf32>
      %20 = arith.addf %17, %19 : vector<128x128xf32>
      %cst_16 = arith.constant 0.000000e+00 : f32
      %21 = vector.broadcast %cst_16 : f32 to vector<128x128xf32>
      %22 = arith.maximumf %20, %21 : vector<128x128xf32>
      %c0_17 = arith.constant 0 : index
      %c0_18 = arith.constant 0 : index
      %23 = vector.load %arg6[%c0_17, %c0_18] : memref<128x128xf32, #tpu.memory_space<vmem>>, vector<128x128xf32>
      %cst_19 = arith.constant dense<0.000000e+00> : vector<128x128xf32>
      %24 = tpu.matmul %22, %23, %cst_19 {dimension_numbers = #tpu.dot_dimension_numbers<[1], [0], [0], [1], [0, 0, 1, 1], [], []>} : vector<128x128xf32>, vector<128x128xf32>, vector<128x128xf32> -> vector<128x128xf32>
      %c0_20 = arith.constant 0 : index
      %c0_21 = arith.constant 0 : index
      %25 = vector.load %arg7[%c0_20, %c0_21] : memref<1x128xf32, #tpu.memory_space<vmem>>, vector<1x128xf32>
      %26 = vector.broadcast %25 : vector<1x128xf32> to vector<128x128xf32>
      %27 = arith.addf %24, %26 : vector<128x128xf32>
      %cst_22 = arith.constant 0.000000e+00 : f32
      %28 = vector.broadcast %cst_22 : f32 to vector<128x128xf32>
      %29 = arith.maximumf %27, %28 : vector<128x128xf32>
      %c0_23 = arith.constant 0 : index
      %c0_24 = arith.constant 0 : index
      %30 = vector.load %arg8[%c0_23, %c0_24] : memref<128x128xf32, #tpu.memory_space<vmem>>, vector<128x128xf32>
      %cst_25 = arith.constant dense<0.000000e+00> : vector<128x128xf32>
      %31 = tpu.matmul %29, %30, %cst_25 {dimension_numbers = #tpu.dot_dimension_numbers<[1], [0], [0], [1], [0, 0, 1, 1], [], []>} : vector<128x128xf32>, vector<128x128xf32>, vector<128x128xf32> -> vector<128x128xf32>
      %c0_26 = arith.constant 0 : index
      %c0_27 = arith.constant 0 : index
      %32 = vector.load %arg9[%c0_26, %c0_27] : memref<1x128xf32, #tpu.memory_space<vmem>>, vector<1x128xf32>
      %33 = vector.broadcast %32 : vector<1x128xf32> to vector<128x128xf32>
      %34 = arith.addf %31, %33 : vector<128x128xf32>
      %cst_28 = arith.constant 0.000000e+00 : f32
      %35 = vector.broadcast %cst_28 : f32 to vector<128x128xf32>
      %36 = arith.maximumf %34, %35 : vector<128x128xf32>
      %c0_29 = arith.constant 0 : index
      %c0_30 = arith.constant 0 : index
      %37 = vector.load %arg10[%c0_29, %c0_30] : memref<128x128xf32, #tpu.memory_space<vmem>>, vector<128x128xf32>
      %cst_31 = arith.constant dense<0.000000e+00> : vector<128x128xf32>
      %38 = tpu.matmul %36, %37, %cst_31 {dimension_numbers = #tpu.dot_dimension_numbers<[1], [0], [0], [1], [0, 0, 1, 1], [], []>} : vector<128x128xf32>, vector<128x128xf32>, vector<128x128xf32> -> vector<128x128xf32>
      %c0_32 = arith.constant 0 : index
      %c0_33 = arith.constant 0 : index
      %39 = vector.load %arg11[%c0_32, %c0_33] : memref<1x128xf32, #tpu.memory_space<vmem>>, vector<1x128xf32>
      %40 = vector.broadcast %39 : vector<1x128xf32> to vector<128x128xf32>
      %41 = arith.addf %38, %40 : vector<128x128xf32>
      %c0_34 = arith.constant 0 : index
      %c0_35 = arith.constant 0 : index
      %42 = vector.load %arg12[%c0_34, %c0_35] : memref<128x128xf32, #tpu.memory_space<vmem>>, vector<128x128xf32>
      tpu.vector_store %arg12[%c0_34, %c0_35], %41 {strides = array<i32>} : memref<128x128xf32, #tpu.memory_space<vmem>>, vector<128x128xf32>,
    } else {
    }
    return
  }
  func.func @transform_0(%arg0: i32, %arg1: i32) -> (i32, i32) {
    %c0_i32 = arith.constant 0 : i32
    return %arg0, %arg1 : i32, i32
  }
  func.func @transform_1(%arg0: i32, %arg1: i32) -> (i32, i32) {
    %c0_i32 = arith.constant 0 : i32
    %c0_i32_0 = arith.constant 0 : i32
    %c0_i32_1 = arith.constant 0 : i32
    return %c0_i32, %c0_i32_0 : i32, i32
  }
  func.func @transform_2(%arg0: i32, %arg1: i32) -> (i32, i32) {
    %c0_i32 = arith.constant 0 : i32
    %c0_i32_0 = arith.constant 0 : i32
    %c0_i32_1 = arith.constant 0 : i32
    return %c0_i32, %c0_i32_0 : i32, i32
  }
  func.func @transform_3(%arg0: i32, %arg1: i32) -> (i32, i32) {
    %c0_i32 = arith.constant 0 : i32
    %c0_i32_0 = arith.constant 0 : i32
    %c0_i32_1 = arith.constant 0 : i32
    return %c0_i32, %c0_i32_0 : i32, i32
  }
  func.func @transform_4(%arg0: i32, %arg1: i32) -> (i32, i32) {
    %c0_i32 = arith.constant 0 : i32
    %c0_i32_0 = arith.constant 0 : i32
    %c0_i32_1 = arith.constant 0 : i32
    return %c0_i32, %c0_i32_0 : i32, i32
  }
  func.func @transform_5(%arg0: i32, %arg1: i32) -> (i32, i32) {
    %c0_i32 = arith.constant 0 : i32
    %c0_i32_0 = arith.constant 0 : i32
    %c0_i32_1 = arith.constant 0 : i32
    return %c0_i32, %c0_i32_0 : i32, i32
  }
  func.func @transform_6(%arg0: i32, %arg1: i32) -> (i32, i32) {
    %c0_i32 = arith.constant 0 : i32
    %c0_i32_0 = arith.constant 0 : i32
    %c0_i32_1 = arith.constant 0 : i32
    return %c0_i32, %c0_i32_0 : i32, i32
  }
  func.func @transform_7(%arg0: i32, %arg1: i32) -> (i32, i32) {
    %c0_i32 = arith.constant 0 : i32
    %c0_i32_0 = arith.constant 0 : i32
    %c0_i32_1 = arith.constant 0 : i32
    return %c0_i32, %c0_i32_0 : i32, i32
  }
  func.func @transform_8(%arg0: i32, %arg1: i32) -> (i32, i32) {
    %c0_i32 = arith.constant 0 : i32
    %c0_i32_0 = arith.constant 0 : i32
    %c0_i32_1 = arith.constant 0 : i32
    return %c0_i32, %c0_i32_0 : i32, i32
  }
  func.func @transform_9(%arg0: i32, %arg1: i32) -> (i32, i32) {
    %c0_i32 = arith.constant 0 : i32
    %c0_i32_0 = arith.constant 0 : i32
    %c0_i32_1 = arith.constant 0 : i32
    return %c0_i32, %c0_i32_0 : i32, i32
  }
  func.func @transform_10(%arg0: i32, %arg1: i32) -> (i32, i32) {
    %c0_i32 = arith.constant 0 : i32
    %c0_i32_0 = arith.constant 0 : i32
    return %arg0, %c0_i32 : i32, i32
  }
}

</mosaic_0001>

<llo_original>
// kernel: tpu_custom_call.1
$region0: #{tpu_custom_call.1}
  #allocation0 [shape = 'u32[]', space=smem, size = 0x4, offset = 0x4, fixed_abs, tag = 'smem constant byte address 0x4 - core index']
  #allocation1 [shape = 'u32[72,128]{1,0:T(1,128)}', space=vmem, size = 0x9000, scoped, tag = 'internal scratch']
  #allocation2 [shape = 'f32[128,128]{1,0:T(8,128)}', space=vmem, size = 0x10000, scoped, tag = 'scratch operand']
  %s0 = inlined_call_operand.hbm [shape: bf16[128,128], index: 0, kind: input, shape index: {}]
  %s1 = inlined_call_operand.hbm [shape: bf16[128,128], index: 1, kind: input, shape index: {}]
  %s2 = inlined_call_operand.hbm [shape: f32[128,128], index: 2, kind: input, shape index: {}]
  %s3 = inlined_call_operand.vmem [shape: f32[1,128], index: 3, kind: input, shape index: {}]
  %s4 = inlined_call_operand.hbm [shape: f32[128,128], index: 4, kind: input, shape index: {}]
  %s5 = inlined_call_operand.vmem [shape: f32[1,128], index: 5, kind: input, shape index: {}]
  %s6 = inlined_call_operand.hbm [shape: f32[128,128], index: 6, kind: input, shape index: {}]
  %s7 = inlined_call_operand.vmem [shape: f32[1,128], index: 7, kind: input, shape index: {}]
  %s8 = inlined_call_operand.hbm [shape: f32[128,128], index: 8, kind: input, shape index: {}]
  %s9 = inlined_call_operand.vmem [shape: f32[1,128], index: 9, kind: input, shape index: {}]
  %s10 = inlined_call_operand.hbm [shape: f32[128,128], index: 10, kind: output, shape index: {}]
  %s11 = sld [smem:[#allocation0]]
  $region82: #{tpu_custom_call.1} parent=0
    _
  %s13 = ssub.s32 1, %s11
  %s14 = scalar_select 0, %s13, %s11
  $region1: #{tpu_custom_call.1} parent=0
    #allocation3 [shape = 'u8[32768]{0}', space=vmem, size = 0x8000, scoped, tag = 'input window, operand 0, single buffered']
    #allocation4 [shape = 's32[1]{0}', space=sflag, size = 0x4, scoped, tag = 'scoped memory for tpu_custom_call.1']
    #allocation5 [shape = 's32[1]{0}', space=sflag, size = 0x4, scoped, tag = 'scoped memory for tpu_custom_call.1']
    #allocation6 [shape = 'u8[32768]{0}', space=vmem, size = 0x8000, scoped, tag = 'input window, operand 1, single buffered']
    #allocation7 [shape = 's32[1]{0}', space=sflag, size = 0x4, scoped, tag = 'scoped memory for tpu_custom_call.1']
    #allocation8 [shape = 'u8[65536]{0}', space=vmem, size = 0x10000, scoped, tag = 'input window, operand 2, single buffered']
    #allocation9 [shape = 'u8[65536]{0}', space=vmem, size = 0x10000, scoped, tag = 'input window, operand 4, single buffered']
    #allocation10 [shape = 's32[1]{0}', space=sflag, size = 0x4, scoped, tag = 'scoped memory for tpu_custom_call.1']
    #allocation11 [shape = 'u8[65536]{0}', space=vmem, size = 0x10000, scoped, tag = 'input window, operand 6, single buffered']
    #allocation12 [shape = 'u8[65536]{0}', space=vmem, size = 0x10000, scoped, tag = 'input window, operand 8, single buffered']
    #allocation13 [shape = 's32[1]{0}', space=sflag, size = 0x4, scoped, tag = 'scoped memory for tpu_custom_call.1']
    #allocation14 [shape = 'u8[65536]{0}', space=vmem, size = 0x10000, scoped, tag = 'output window, operand 0, single buffered']
    %15 = vsyncpa [#allocation4], 0
    %16 = vsyncpa [#allocation7], 0
    %17 = vsyncpa [#allocation10], 0
    %18 = vsyncpa [#allocation13], 0
    %19 = vsyncpa [#allocation5], 0
    // Predicated region
    $region2: #{tpu_custom_call.1} parent=1 // pred_check
      _
    $region3: #{tpu_custom_call.1} parent=1 // pred_check_branch
      %21 = sbr.rel (0) target = $region5
    $region4: #{tpu_custom_call.1} parent=1 // pred_region
      %23 = vsyncadd [#allocation4], 0
      %s24 = sshll.u32 %s0, 4
      %s25 = int_to_ptr.hbm [resolvable:$true] %s24
      %s26 = sshll.u32 [#allocation3], 4
      %s27 = int_to_ptr.vmem [resolvable:$true] %s26
      %32 = dma.hbm_to_vmem [thread:$0]  %s25, 1024, %s27, [#allocation4], 64, 64, 4
    $region5: #{tpu_custom_call.1} parent=1 // pred_fallthru
      _
    // Predicated region
    $region6: #{tpu_custom_call.1} parent=1 // pred_check
      _
    $region7: #{tpu_custom_call.1} parent=1 // pred_check_branch
      %34 = sbr.rel (0) target = $region9
    $region8: #{tpu_custom_call.1} parent=1 // pred_region
      %36 = vsyncadd [#allocation7], 0
      %s37 = sshll.u32 %s1, 4
      %s38 = int_to_ptr.hbm [resolvable:$true] %s37
      %s39 = sshll.u32 [#allocation6], 4
      %s40 = int_to_ptr.vmem [resolvable:$true] %s39
      %45 = dma.hbm_to_vmem [thread:$0]  %s38, 1024, %s40, [#allocation7], 64, 64, 4
    $region9: #{tpu_custom_call.1} parent=1 // pred_fallthru
      _
    // Predicated region
    $region10: #{tpu_custom_call.1} parent=1 // pred_check
      _
    $region11: #{tpu_custom_call.1} parent=1 // pred_check_branch
      %47 = sbr.rel (0) target = $region13
    $region12: #{tpu_custom_call.1} parent=1 // pred_region
      %49 = vsyncadd [#allocation7], 0
      %s50 = sshll.u32 %s2, 4
      %s51 = int_to_ptr.hbm [resolvable:$true] %s50
      %s52 = sshll.u32 [#allocation8], 4
      %s53 = int_to_ptr.vmem [resolvable:$true] %s52
      %58 = dma.hbm_to_vmem [thread:$0]  %s51, 2048, %s53, [#allocation7], 128, 128, 8
    $region13: #{tpu_custom_call.1} parent=1 // pred_fallthru
      _
    // Predicated region
    $region14: #{tpu_custom_call.1} parent=1 // pred_check
      _
    $region15: #{tpu_custom_call.1} parent=1 // pred_check_branch
      %60 = sbr.rel (0) target = $region17
    $region16: #{tpu_custom_call.1} parent=1 // pred_region
      _
    $region17: #{tpu_custom_call.1} parent=1 // pred_fallthru
      _
    // Predicated region
    $region18: #{tpu_custom_call.1} parent=1 // pred_check
      _
    $region19: #{tpu_custom_call.1} parent=1 // pred_check_branch
      %62 = sbr.rel (0) target = $region21
    $region20: #{tpu_custom_call.1} parent=1 // pred_region
      %64 = vsyncadd [#allocation10], 0
      %s65 = sshll.u32 %s4, 4
      %s66 = int_to_ptr.hbm [resolvable:$true] %s65
      %s67 = sshll.u32 [#allocation9], 4
      %s68 = int_to_ptr.vmem [resolvable:$true] %s67
      %73 = dma.hbm_to_vmem [thread:$0]  %s66, 2048, %s68, [#allocation10], 128, 128, 8
    $region21: #{tpu_custom_call.1} parent=1 // pred_fallthru
      _
    // Predicated region
    $region22: #{tpu_custom_call.1} parent=1 // pred_check
      _
    $region23: #{tpu_custom_call.1} parent=1 // pred_check_branch
      %75 = sbr.rel (0) target = $region25
    $region24: #{tpu_custom_call.1} parent=1 // pred_region
      _
    $region25: #{tpu_custom_call.1} parent=1 // pred_fallthru
      _
    // Predicated region
    $region26: #{tpu_custom_call.1} parent=1 // pred_check
      _
    $region27: #{tpu_custom_call.1} parent=1 // pred_check_branch
      %77 = sbr.rel (0) target = $region29
    $region28: #{tpu_custom_call.1} parent=1 // pred_region
      %79 = vsyncadd [#allocation10], 0
      %s80 = sshll.u32 %s6, 4
      %s81 = int_to_ptr.hbm [resolvable:$true] %s80
      %s82 = sshll.u32 [#allocation11], 4
      %s83 = int_to_ptr.vmem [resolvable:$true] %s82
      %88 = dma.hbm_to_vmem [thread:$0]  %s81, 2048, %s83, [#allocation10], 128, 128, 8
    $region29: #{tpu_custom_call.1} parent=1 // pred_fallthru
      _
    // Predicated region
    $region30: #{tpu_custom_call.1} parent=1 // pred_check
      _
    $region31: #{tpu_custom_call.1} parent=1 // pred_check_branch
      %90 = sbr.rel (0) target = $region33
    $region32: #{tpu_custom_call.1} parent=1 // pred_region
      _
    $region33: #{tpu_custom_call.1} parent=1 // pred_fallthru
      _
    // Predicated region
    $region34: #{tpu_custom_call.1} parent=1 // pred_check
      _
    $region35: #{tpu_custom_call.1} parent=1 // pred_check_branch
      %92 = sbr.rel (0) target = $region37
    $region36: #{tpu_custom_call.1} parent=1 // pred_region
      %94 = vsyncadd [#allocation13], 0
      %s95 = sshll.u32 %s8, 4
      %s96 = int_to_ptr.hbm [resolvable:$true] %s95
      %s97 = sshll.u32 [#allocation12], 4
      %s98 = int_to_ptr.vmem [resolvable:$true] %s97
      %103 = dma.hbm_to_vmem [thread:$0]  %s96, 2048, %s98, [#allocation13], 128, 128, 8
    $region37: #{tpu_custom_call.1} parent=1 // pred_fallthru
      _
    // Predicated region
    $region38: #{tpu_custom_call.1} parent=1 // pred_check
      _
    $region39: #{tpu_custom_call.1} parent=1 // pred_check_branch
      %105 = sbr.rel (0) target = $region41
    $region40: #{tpu_custom_call.1} parent=1 // pred_region
      _
    $region41: #{tpu_custom_call.1} parent=1 // pred_fallthru
      _
    // Predicated region
    $region42: #{tpu_custom_call.1} parent=1 // pred_check
      _
    $region43: #{tpu_custom_call.1} parent=1 // pred_check_branch
      %107 = sbr.rel (0) target = $region45
    $region44: #{tpu_custom_call.1} parent=1 // pred_region
      %109 = dma.done [#allocation4], 1024
    $region45: #{tpu_custom_call.1} parent=1 // pred_fallthru
      _
    // Predicated region
    $region46: #{tpu_custom_call.1} parent=1 // pred_check
      _
    $region47: #{tpu_custom_call.1} parent=1 // pred_check_branch
      %111 = sbr.rel (0) target = $region49
    $region48: #{tpu_custom_call.1} parent=1 // pred_region
      %113 = dma.done [#allocation7], 1024
    $region49: #{tpu_custom_call.1} parent=1 // pred_fallthru
      _
    // Predicated region
    $region50: #{tpu_custom_call.1} parent=1 // pred_check
      _
    $region51: #{tpu_custom_call.1} parent=1 // pred_check_branch
      %115 = sbr.rel (0) target = $region53
    $region52: #{tpu_custom_call.1} parent=1 // pred_region
      %117 = dma.done [#allocation7], 2048
    $region53: #{tpu_custom_call.1} parent=1 // pred_fallthru
      _
    // Predicated region
    $region54: #{tpu_custom_call.1} parent=1 // pred_check
      _
    $region55: #{tpu_custom_call.1} parent=1 // pred_check_branch
      %119 = sbr.rel (0) target = $region57
    $region56: #{tpu_custom_call.1} parent=1 // pred_region
      %121 = dma.done [#allocation10], 2048
    $region57: #{tpu_custom_call.1} parent=1 // pred_fallthru
      _
    // Predicated region
    $region58: #{tpu_custom_call.1} parent=1 // pred_check
      _
    $region59: #{tpu_custom_call.1} parent=1 // pred_check_branch
      %123 = sbr.rel (0) target = $region61
    $region60: #{tpu_custom_call.1} parent=1 // pred_region
      %125 = dma.done [#allocation10], 2048
    $region61: #{tpu_custom_call.1} parent=1 // pred_fallthru
      _
    // Predicated region
    $region62: #{tpu_custom_call.1} parent=1 // pred_check
      _
    $region63: #{tpu_custom_call.1} parent=1 // pred_check_branch
      %127 = sbr.rel (0) target = $region65
    $region64: #{tpu_custom_call.1} parent=1 // pred_region
      %129 = dma.done [#allocation13], 2048
    $region65: #{tpu_custom_call.1} parent=1 // pred_fallthru
      _
    %p130 = scmp.eq.s32.totalorder 0, 0
    // Predicated region
    $region66: #{tpu_custom_call.1} parent=1 // pred_check
      %p131 = pneg %p130
    $region67: #{tpu_custom_call.1} parent=1 // pred_check_branch
      %133 = sbr.rel (%p131) target = $region69
    $region68: #{tpu_custom_call.1} parent=1 // pred_region
      %134 = vst [vmem:[#allocation2] sm:$0xff] 0.0
      %135 = vst [vmem:[#allocation2 + $0x8] sm:$0xff] 0.0
      %136 = vst [vmem:[#allocation2 + $0x10] sm:$0xff] 0.0
      %137 = vst [vmem:[#allocation2 + $0x18] sm:$0xff] 0.0
      %138 = vst [vmem:[#allocation2 + $0x20] sm:$0xff] 0.0
      %139 = vst [vmem:[#allocation2 + $0x28] sm:$0xff] 0.0
      %140 = vst [vmem:[#allocation2 + $0x30] sm:$0xff] 0.0
      %141 = vst [vmem:[#allocation2 + $0x38] sm:$0xff] 0.0
      %142 = vst [vmem:[#allocation2 + $0x40] sm:$0xff] 0.0
      %143 = vst [vmem:[#allocation2 + $0x48] sm:$0xff] 0.0
      %144 = vst [vmem:[#allocation2 + $0x50] sm:$0xff] 0.0
      %145 = vst [vmem:[#allocation2 + $0x58] sm:$0xff] 0.0
      %146 = vst [vmem:[#allocation2 + $0x60] sm:$0xff] 0.0
      %147 = vst [vmem:[#allocation2 + $0x68] sm:$0xff] 0.0
      %148 = vst [vmem:[#allocation2 + $0x70] sm:$0xff] 0.0
      %149 = vst [vmem:[#allocation2 + $0x78] sm:$0xff] 0.0
    $region69: #{tpu_custom_call.1} parent=1 // pred_fallthru
      _
    %s150 = smul.u32 0, 128
    %s151 = sshra.s32 %s150, 3
    %s152 = sand.u32 %s150, 7
    %s153 = smul.addr %s151, 4
    %s154 = scalar_lea.vmem [#allocation6], %s153
    %v155 = vld [vmem:[%s154] sm:$0xf]
    %v156 = vld [vmem:[%s154 + $0x4] sm:$0xf]
    %v157 = vld [vmem:[%s154 + $0x8] sm:$0xf]
    %v158 = vld [vmem:[%s154 + $0xc] sm:$0xf]
    %v159 = vld [vmem:[%s154 + $0x10] sm:$0xf]
    %v160 = vld [vmem:[%s154 + $0x14] sm:$0xf]
    %v161 = vld [vmem:[%s154 + $0x18] sm:$0xf]
    %v162 = vld [vmem:[%s154 + $0x1c] sm:$0xf]
    %v163 = vld [vmem:[%s154 + $0x20] sm:$0xf]
    %v164 = vld [vmem:[%s154 + $0x24] sm:$0xf]
    %v165 = vld [vmem:[%s154 + $0x28] sm:$0xf]
    %v166 = vld [vmem:[%s154 + $0x2c] sm:$0xf]
    %v167 = vld [vmem:[%s154 + $0x30] sm:$0xf]
    %v168 = vld [vmem:[%s154 + $0x34] sm:$0xf]
    %v169 = vld [vmem:[%s154 + $0x38] sm:$0xf]
    %v170 = vld [vmem:[%s154 + $0x3c] sm:$0xf]
    %v171 = vld [vmem:[#allocation2] sm:$0xff]
    %v172 = vld [vmem:[#allocation2 + $0x8] sm:$0xff]
    %v173 = vld [vmem:[#allocation2 + $0x10] sm:$0xff]
    %v174 = vld [vmem:[#allocation2 + $0x18] sm:$0xff]
    %v175 = vld [vmem:[#allocation2 + $0x20] sm:$0xff]
    %v176 = vld [vmem:[#allocation2 + $0x28] sm:$0xff]
    %v177 = vld [vmem:[#allocation2 + $0x30] sm:$0xff]
    %v178 = vld [vmem:[#allocation2 + $0x38] sm:$0xff]
    %v179 = vld [vmem:[#allocation2 + $0x40] sm:$0xff]
    %v180 = vld [vmem:[#allocation2 + $0x48] sm:$0xff]
    %v181 = vld [vmem:[#allocation2 + $0x50] sm:$0xff]
    %v182 = vld [vmem:[#allocation2 + $0x58] sm:$0xff]
    %v183 = vld [vmem:[#allocation2 + $0x60] sm:$0xff]
    %v184 = vld [vmem:[#allocation2 + $0x68] sm:$0xff]
    %v185 = vld [vmem:[#allocation2 + $0x70] sm:$0xff]
    %v186 = vld [vmem:[#allocation2 + $0x78] sm:$0xff]
    %v187 = vld [vmem:[#allocation3] sm:$0xf]
    %v188 = vld [vmem:[#allocation3 + $0x4] sm:$0xf]
    %v189 = vld [vmem:[#allocation3 + $0x8] sm:$0xf]
    %v190 = vld [vmem:[#allocation3 + $0xc] sm:$0xf]
    %v191 = vld [vmem:[#allocation3 + $0x10] sm:$0xf]
    %v192 = vld [vmem:[#allocation3 + $0x14] sm:$0xf]
    %v193 = vld [vmem:[#allocation3 + $0x18] sm:$0xf]
    %v194 = vld [vmem:[#allocation3 + $0x1c] sm:$0xf]
    %v195 = vld [vmem:[#allocation3 + $0x20] sm:$0xf]
    %v196 = vld [vmem:[#allocation3 + $0x24] sm:$0xf]
    %v197 = vld [vmem:[#allocation3 + $0x28] sm:$0xf]
    %v198 = vld [vmem:[#allocation3 + $0x2c] sm:$0xf]
    %v199 = vld [vmem:[#allocation3 + $0x30] sm:$0xf]
    %v200 = vld [vmem:[#allocation3 + $0x34] sm:$0xf]
    %v201 = vld [vmem:[#allocation3 + $0x38] sm:$0xf]
    %v202 = vld [vmem:[#allocation3 + $0x3c] sm:$0xf]
    %v219 = vunpack.c.l.b16 %v187
    %v220 = vunpack.c.l.b16 %v188
    %v221 = vunpack.c.l.b16 %v189
    %v222 = vunpack.c.l.b16 %v190
    %v223 = vunpack.c.l.b16 %v191
    %v224 = vunpack.c.l.b16 %v192
    %v225 = vunpack.c.l.b16 %v193
    %v226 = vunpack.c.l.b16 %v194
    %v227 = vunpack.c.l.b16 %v195
    %v228 = vunpack.c.l.b16 %v196
    %v229 = vunpack.c.l.b16 %v197
    %v230 = vunpack.c.l.b16 %v198
    %v231 = vunpack.c.l.b16 %v199
    %v232 = vunpack.c.l.b16 %v200
    %v233 = vunpack.c.l.b16 %v201
    %v234 = vunpack.c.l.b16 %v202
    %v235 = vpack.c.b16 %v220, %v219
    %v236 = vpack.c.b16 %v222, %v221
    %v237 = vpack.c.b16 %v224, %v223
    %v238 = vpack.c.b16 %v226, %v225
    %v239 = vpack.c.b16 %v228, %v227
    %v240 = vpack.c.b16 %v230, %v229
    %v241 = vpack.c.b16 %v232, %v231
    %v242 = vpack.c.b16 %v234, %v233
    %v267 = vunpack.c.l.b16 %v155
    %v268 = vunpack.c.l.b16 %v156
    %v269 = vunpack.c.l.b16 %v157
    %v270 = vunpack.c.l.b16 %v158
    %v271 = vunpack.c.l.b16 %v159
    %v272 = vunpack.c.l.b16 %v160
    %v273 = vunpack.c.l.b16 %v161
    %v274 = vunpack.c.l.b16 %v162
    %v275 = vunpack.c.l.b16 %v163
    %v276 = vunpack.c.l.b16 %v164
    %v277 = vunpack.c.l.b16 %v165
    %v278 = vunpack.c.l.b16 %v166
    %v279 = vunpack.c.l.b16 %v167
    %v280 = vunpack.c.l.b16 %v168
    %v281 = vunpack.c.l.b16 %v169
    %v282 = vunpack.c.l.b16 %v170
    %v283 = vpack.c.b16 %v268, %v267
    %v284 = vpack.c.b16 %v270, %v269
    %v285 = vpack.c.b16 %v272, %v271
    %v286 = vpack.c.b16 %v274, %v273
    %v287 = vpack.c.b16 %v276, %v275
    %v288 = vpack.c.b16 %v278, %v277
    %v289 = vpack.c.b16 %v280, %v279
    %v290 = vpack.c.b16 %v282, %v281
    %299 = vmatpush.bf16.msra.mxu0 %v290
    %300 = vmatpush.bf16.msra.mxu0 %v289
    %301 = vmatpush.bf16.msra.mxu0 %v288
    %302 = vmatpush.bf16.msra.mxu0 %v287
    %303 = vmatpush.bf16.msra.mxu0 %v286
    %304 = vmatpush.bf16.msra.mxu0 %v285
    %305 = vmatpush.bf16.msra.mxu0 %v284
    %306 = vmatpush.bf16.msra.mxu0 %v283
    %307 = vmatmul.bf16.gmra.mxu0 %v235
    %v308 = vpop.f32.mrf.mxu0
    %v309 = vadd.f32 0.0, %v308
    %v310 = vpop.f32.mrf.mxu0
    %v311 = vadd.f32 0.0, %v310
    %312 = vmatmul.bf16.gmra.mxu0 %v236
    %v313 = vpop.f32.mrf.mxu0
    %v314 = vadd.f32 0.0, %v313
    %v315 = vpop.f32.mrf.mxu0
    %v316 = vadd.f32 0.0, %v315
    %317 = vmatmul.bf16.gmra.mxu0 %v237
    %v318 = vpop.f32.mrf.mxu0
    %v319 = vadd.f32 0.0, %v318
    %v320 = vpop.f32.mrf.mxu0
    %v321 = vadd.f32 0.0, %v320
    %322 = vmatmul.bf16.gmra.mxu0 %v238
    %v323 = vpop.f32.mrf.mxu0
    %v324 = vadd.f32 0.0, %v323
    %v325 = vpop.f32.mrf.mxu0
    %v326 = vadd.f32 0.0, %v325
    %327 = vmatmul.bf16.gmra.mxu0 %v239
    %v328 = vpop.f32.mrf.mxu0
    %v329 = vadd.f32 0.0, %v328
    %v330 = vpop.f32.mrf.mxu0
    %v331 = vadd.f32 0.0, %v330
    %332 = vmatmul.bf16.gmra.mxu0 %v240
    %v333 = vpop.f32.mrf.mxu0
    %v334 = vadd.f32 0.0, %v333
    %v335 = vpop.f32.mrf.mxu0
    %v336 = vadd.f32 0.0, %v335
    %337 = vmatmul.bf16.gmra.mxu0 %v241
    %v338 = vpop.f32.mrf.mxu0
    %v339 = vadd.f32 0.0, %v338
    %v340 = vpop.f32.mrf.mxu0
    %v341 = vadd.f32 0.0, %v340
    %342 = vmatmul.bf16.gmra.mxu0 %v242
    %v343 = vpop.f32.mrf.mxu0
    %v344 = vadd.f32 0.0, %v343
    %v345 = vpop.f32.mrf.mxu0
    %v346 = vadd.f32 0.0, %v345
    %347 = vdwg.mxu0
    %v348 = vadd.f32 %v171, %v309
    %v349 = vadd.f32 %v172, %v311
    %v350 = vadd.f32 %v173, %v314
    %v351 = vadd.f32 %v174, %v316
    %v352 = vadd.f32 %v175, %v319
    %v353 = vadd.f32 %v176, %v321
    %v354 = vadd.f32 %v177, %v324
    %v355 = vadd.f32 %v178, %v326
    %v356 = vadd.f32 %v179, %v329
    %v357 = vadd.f32 %v180, %v331
    %v358 = vadd.f32 %v181, %v334
    %v359 = vadd.f32 %v182, %v336
    %v360 = vadd.f32 %v183, %v339
    %v361 = vadd.f32 %v184, %v341
    %v362 = vadd.f32 %v185, %v344
    %v363 = vadd.f32 %v186, %v346
    %364 = vst [vmem:[#allocation2] sm:$0xff] %v348
    %365 = vst [vmem:[#allocation2 + $0x8] sm:$0xff] %v349
    %366 = vst [vmem:[#allocation2 + $0x10] sm:$0xff] %v350
    %367 = vst [vmem:[#allocation2 + $0x18] sm:$0xff] %v351
    %368 = vst [vmem:[#allocation2 + $0x20] sm:$0xff] %v352
    %369 = vst [vmem:[#allocation2 + $0x28] sm:$0xff] %v353
    %370 = vst [vmem:[#allocation2 + $0x30] sm:$0xff] %v354
    %371 = vst [vmem:[#allocation2 + $0x38] sm:$0xff] %v355
    %372 = vst [vmem:[#allocation2 + $0x40] sm:$0xff] %v356
    %373 = vst [vmem:[#allocation2 + $0x48] sm:$0xff] %v357
    %374 = vst [vmem:[#allocation2 + $0x50] sm:$0xff] %v358
    %375 = vst [vmem:[#allocation2 + $0x58] sm:$0xff] %v359
    %376 = vst [vmem:[#allocation2 + $0x60] sm:$0xff] %v360
    %377 = vst [vmem:[#allocation2 + $0x68] sm:$0xff] %v361
    %378 = vst [vmem:[#allocation2 + $0x70] sm:$0xff] %v362
    %379 = vst [vmem:[#allocation2 + $0x78] sm:$0xff] %v363
    // Predicated region
    $region70: #{tpu_custom_call.1} parent=1 // pred_check
      %p380 = pneg %p130
    $region71: #{tpu_custom_call.1} parent=1 // pred_check_branch
      %382 = sbr.rel (%p380) target = $region73
    $region72: #{tpu_custom_call.1} parent=1 // pred_region
      %v383 = vld [vmem:[#allocation2] sm:$0xff]
      %v384 = vld [vmem:[#allocation2 + $0x8] sm:$0xff]
      %v385 = vld [vmem:[#allocation2 + $0x10] sm:$0xff]
      %v386 = vld [vmem:[#allocation2 + $0x18] sm:$0xff]
      %v387 = vld [vmem:[#allocation2 + $0x20] sm:$0xff]
      %v388 = vld [vmem:[#allocation2 + $0x28] sm:$0xff]
      %v389 = vld [vmem:[#allocation2 + $0x30] sm:$0xff]
      %v390 = vld [vmem:[#allocation2 + $0x38] sm:$0xff]
      %v391 = vld [vmem:[#allocation2 + $0x40] sm:$0xff]
      %v392 = vld [vmem:[#allocation2 + $0x48] sm:$0xff]
      %v393 = vld [vmem:[#allocation2 + $0x50] sm:$0xff]
      %v394 = vld [vmem:[#allocation2 + $0x58] sm:$0xff]
      %v395 = vld [vmem:[#allocation2 + $0x60] sm:$0xff]
      %v396 = vld [vmem:[#allocation2 + $0x68] sm:$0xff]
      %v397 = vld [vmem:[#allocation2 + $0x70] sm:$0xff]
      %v398 = vld [vmem:[#allocation2 + $0x78] sm:$0xff]
      %v399 = vld [vmem:[#allocation8] sm:$0xff]
      %v400 = vld [vmem:[#allocation8 + $0x8] sm:$0xff]
      %v401 = vld [vmem:[#allocation8 + $0x10] sm:$0xff]
      %v402 = vld [vmem:[#allocation8 + $0x18] sm:$0xff]
      %v403 = vld [vmem:[#allocation8 + $0x20] sm:$0xff]
      %v404 = vld [vmem:[#allocation8 + $0x28] sm:$0xff]
      %v405 = vld [vmem:[#allocation8 + $0x30] sm:$0xff]
      %v406 = vld [vmem:[#allocation8 + $0x38] sm:$0xff]
      %v407 = vld [vmem:[#allocation8 + $0x40] sm:$0xff]
      %v408 = vld [vmem:[#allocation8 + $0x48] sm:$0xff]
      %v409 = vld [vmem:[#allocation8 + $0x50] sm:$0xff]
      %v410 = vld [vmem:[#allocation8 + $0x58] sm:$0xff]
      %v411 = vld [vmem:[#allocation8 + $0x60] sm:$0xff]
      %v412 = vld [vmem:[#allocation8 + $0x68] sm:$0xff]
      %v413 = vld [vmem:[#allocation8 + $0x70] sm:$0xff]
      %v414 = vld [vmem:[#allocation8 + $0x78] sm:$0xff]
      %v415 = vld [vmem:[%s3] sm:$0x1]
      %v417 = vperm.slane %v415, 0
      %419 = vmatpush.msra.mxu0 %v414
      %420 = vmatpush.msra.mxu0 %v413
      %421 = vmatpush.msra.mxu0 %v412
      %422 = vmatpush.msra.mxu0 %v411
      %423 = vmatpush.msra.mxu0 %v410
      %424 = vmatpush.msra.mxu0 %v409
      %425 = vmatpush.msra.mxu0 %v408
      %426 = vmatpush.msra.mxu0 %v407
      %427 = vmatpush.msra.mxu0 %v406
      %428 = vmatpush.msra.mxu0 %v405
      %429 = vmatpush.msra.mxu0 %v404
      %430 = vmatpush.msra.mxu0 %v403
      %431 = vmatpush.msra.mxu0 %v402
      %432 = vmatpush.msra.mxu0 %v401
      %433 = vmatpush.msra.mxu0 %v400
      %434 = vmatpush.msra.mxu0 %v399
      %435 = vmatmul.f32.gmra.mxu0 %v383
      %v436 = vpop.f32.mrf.mxu0
      %v437 = vadd.f32 %v417, %v436
      %438 = vmatmul.f32.gmra.mxu0 %v384
      %v439 = vpop.f32.mrf.mxu0
      %v440 = vadd.f32 %v417, %v439
      %441 = vmatmul.f32.gmra.mxu0 %v385
      %v442 = vpop.f32.mrf.mxu0
      %v443 = vadd.f32 %v417, %v442
      %444 = vmatmul.f32.gmra.mxu0 %v386
      %v445 = vpop.f32.mrf.mxu0
      %v446 = vadd.f32 %v417, %v445
      %447 = vmatmul.f32.gmra.mxu0 %v387
      %v448 = vpop.f32.mrf.mxu0
      %v449 = vadd.f32 %v417, %v448
      %450 = vmatmul.f32.gmra.mxu0 %v388
      %v451 = vpop.f32.mrf.mxu0
      %v452 = vadd.f32 %v417, %v451
      %453 = vmatmul.f32.gmra.mxu0 %v389
      %v454 = vpop.f32.mrf.mxu0
      %v455 = vadd.f32 %v417, %v454
      %456 = vmatmul.f32.gmra.mxu0 %v390
      %v457 = vpop.f32.mrf.mxu0
      %v458 = vadd.f32 %v417, %v457
      %459 = vmatmul.f32.gmra.mxu0 %v391
      %v460 = vpop.f32.mrf.mxu0
      %v461 = vadd.f32 %v417, %v460
      %462 = vmatmul.f32.gmra.mxu0 %v392
      %v463 = vpop.f32.mrf.mxu0
      %v464 = vadd.f32 %v417, %v463
      %465 = vmatmul.f32.gmra.mxu0 %v393
      %v466 = vpop.f32.mrf.mxu0
      %v467 = vadd.f32 %v417, %v466
      %468 = vmatmul.f32.gmra.mxu0 %v394
      %v469 = vpop.f32.mrf.mxu0
      %v470 = vadd.f32 %v417, %v469
      %471 = vmatmul.f32.gmra.mxu0 %v395
      %v472 = vpop.f32.mrf.mxu0
      %v473 = vadd.f32 %v417, %v472
      %474 = vmatmul.f32.gmra.mxu0 %v396
      %v475 = vpop.f32.mrf.mxu0
      %v476 = vadd.f32 %v417, %v475
      %477 = vmatmul.f32.gmra.mxu0 %v397
      %v478 = vpop.f32.mrf.mxu0
      %v479 = vadd.f32 %v417, %v478
      %480 = vmatmul.f32.gmra.mxu0 %v398
      %v481 = vpop.f32.mrf.mxu0
      %v482 = vadd.f32 %v417, %v481
      %483 = vdwg.mxu0
      %v484 = vmax.f32 %v437, 0.0
      %v485 = vmax.f32 %v440, 0.0
      %v486 = vmax.f32 %v443, 0.0
      %v487 = vmax.f32 %v446, 0.0
      %v488 = vmax.f32 %v449, 0.0
      %v489 = vmax.f32 %v452, 0.0
      %v490 = vmax.f32 %v455, 0.0
      %v491 = vmax.f32 %v458, 0.0
      %v492 = vmax.f32 %v461, 0.0
      %v493 = vmax.f32 %v464, 0.0
      %v494 = vmax.f32 %v467, 0.0
      %v495 = vmax.f32 %v470, 0.0
      %v496 = vmax.f32 %v473, 0.0
      %v497 = vmax.f32 %v476, 0.0
      %v498 = vmax.f32 %v479, 0.0
      %v499 = vmax.f32 %v482, 0.0
      %v500 = vld [vmem:[#allocation9] sm:$0xff]
      %v501 = vld [vmem:[#allocation9 + $0x8] sm:$0xff]
      %v502 = vld [vmem:[#allocation9 + $0x10] sm:$0xff]
      %v503 = vld [vmem:[#allocation9 + $0x18] sm:$0xff]
      %v504 = vld [vmem:[#allocation9 + $0x20] sm:$0xff]
      %v505 = vld [vmem:[#allocation9 + $0x28] sm:$0xff]
      %v506 = vld [vmem:[#allocation9 + $0x30] sm:$0xff]
      %v507 = vld [vmem:[#allocation9 + $0x38] sm:$0xff]
      %v508 = vld [vmem:[#allocation9 + $0x40] sm:$0xff]
      %v509 = vld [vmem:[#allocation9 + $0x48] sm:$0xff]
      %v510 = vld [vmem:[#allocation9 + $0x50] sm:$0xff]
      %v511 = vld [vmem:[#allocation9 + $0x58] sm:$0xff]
      %v512 = vld [vmem:[#allocation9 + $0x60] sm:$0xff]
      %v513 = vld [vmem:[#allocation9 + $0x68] sm:$0xff]
      %v514 = vld [vmem:[#allocation9 + $0x70] sm:$0xff]
      %v515 = vld [vmem:[#allocation9 + $0x78] sm:$0xff]
      %v516 = vld [vmem:[%s5] sm:$0x1]
      %v518 = vperm.slane %v516, 0
      %520 = vmatpush.msra.mxu0 %v515
      %521 = vmatpush.msra.mxu0 %v514
      %522 = vmatpush.msra.mxu0 %v513
      %523 = vmatpush.msra.mxu0 %v512
      %524 = vmatpush.msra.mxu0 %v511
      %525 = vmatpush.msra.mxu0 %v510
      %526 = vmatpush.msra.mxu0 %v509
      %527 = vmatpush.msra.mxu0 %v508
      %528 = vmatpush.msra.mxu0 %v507
      %529 = vmatpush.msra.mxu0 %v506
      %530 = vmatpush.msra.mxu0 %v505
      %531 = vmatpush.msra.mxu0 %v504
      %532 = vmatpush.msra.mxu0 %v503
      %533 = vmatpush.msra.mxu0 %v502
      %534 = vmatpush.msra.mxu0 %v501
      %535 = vmatpush.msra.mxu0 %v500
      %536 = vmatmul.f32.gmra.mxu0 %v484
      %v537 = vpop.f32.mrf.mxu0
      %v538 = vadd.f32 %v518, %v537
      %539 = vmatmul.f32.gmra.mxu0 %v485
      %v540 = vpop.f32.mrf.mxu0
      %v541 = vadd.f32 %v518, %v540
      %542 = vmatmul.f32.gmra.mxu0 %v486
      %v543 = vpop.f32.mrf.mxu0
      %v544 = vadd.f32 %v518, %v543
      %545 = vmatmul.f32.gmra.mxu0 %v487
      %v546 = vpop.f32.mrf.mxu0
      %v547 = vadd.f32 %v518, %v546
      %548 = vmatmul.f32.gmra.mxu0 %v488
      %v549 = vpop.f32.mrf.mxu0
      %v550 = vadd.f32 %v518, %v549
      %551 = vmatmul.f32.gmra.mxu0 %v489
      %v552 = vpop.f32.mrf.mxu0
      %v553 = vadd.f32 %v518, %v552
      %554 = vmatmul.f32.gmra.mxu0 %v490
      %v555 = vpop.f32.mrf.mxu0
      %v556 = vadd.f32 %v518, %v555
      %557 = vmatmul.f32.gmra.mxu0 %v491
      %v558 = vpop.f32.mrf.mxu0
      %v559 = vadd.f32 %v518, %v558
      %560 = vmatmul.f32.gmra.mxu0 %v492
      %v561 = vpop.f32.mrf.mxu0
      %v562 = vadd.f32 %v518, %v561
      %563 = vmatmul.f32.gmra.mxu0 %v493
      %v564 = vpop.f32.mrf.mxu0
      %v565 = vadd.f32 %v518, %v564
      %566 = vmatmul.f32.gmra.mxu0 %v494
      %v567 = vpop.f32.mrf.mxu0
      %v568 = vadd.f32 %v518, %v567
      %569 = vmatmul.f32.gmra.mxu0 %v495
      %v570 = vpop.f32.mrf.mxu0
      %v571 = vadd.f32 %v518, %v570
      %572 = vmatmul.f32.gmra.mxu0 %v496
      %v573 = vpop.f32.mrf.mxu0
      %v574 = vadd.f32 %v518, %v573
      %575 = vmatmul.f32.gmra.mxu0 %v497
      %v576 = vpop.f32.mrf.mxu0
      %v577 = vadd.f32 %v518, %v576
      %578 = vmatmul.f32.gmra.mxu0 %v498
      %v579 = vpop.f32.mrf.mxu0
      %v580 = vadd.f32 %v518, %v579
      %581 = vmatmul.f32.gmra.mxu0 %v499
      %v582 = vpop.f32.mrf.mxu0
      %v583 = vadd.f32 %v518, %v582
      %584 = vdwg.mxu0
      %v585 = vmax.f32 %v538, 0.0
      %v586 = vmax.f32 %v541, 0.0
      %v587 = vmax.f32 %v544, 0.0
      %v588 = vmax.f32 %v547, 0.0
      %v589 = vmax.f32 %v550, 0.0
      %v590 = vmax.f32 %v553, 0.0
      %v591 = vmax.f32 %v556, 0.0
      %v592 = vmax.f32 %v559, 0.0
      %v593 = vmax.f32 %v562, 0.0
      %v594 = vmax.f32 %v565, 0.0
      %v595 = vmax.f32 %v568, 0.0
      %v596 = vmax.f32 %v571, 0.0
      %v597 = vmax.f32 %v574, 0.0
      %v598 = vmax.f32 %v577, 0.0
      %v599 = vmax.f32 %v580, 0.0
      %v600 = vmax.f32 %v583, 0.0
      %v601 = vld [vmem:[#allocation11] sm:$0xff]
      %v602 = vld [vmem:[#allocation11 + $0x8] sm:$0xff]
      %v603 = vld [vmem:[#allocation11 + $0x10] sm:$0xff]
      %v604 = vld [vmem:[#allocation11 + $0x18] sm:$0xff]
      %v605 = vld [vmem:[#allocation11 + $0x20] sm:$0xff]
      %v606 = vld [vmem:[#allocation11 + $0x28] sm:$0xff]
      %v607 = vld [vmem:[#allocation11 + $0x30] sm:$0xff]
      %v608 = vld [vmem:[#allocation11 + $0x38] sm:$0xff]
      %v609 = vld [vmem:[#allocation11 + $0x40] sm:$0xff]
      %v610 = vld [vmem:[#allocation11 + $0x48] sm:$0xff]
      %v611 = vld [vmem:[#allocation11 + $0x50] sm:$0xff]
      %v612 = vld [vmem:[#allocation11 + $0x58] sm:$0xff]
      %v613 = vld [vmem:[#allocation11 + $0x60] sm:$0xff]
      %v614 = vld [vmem:[#allocation11 + $0x68] sm:$0xff]
      %v615 = vld [vmem:[#allocation11 + $0x70] sm:$0xff]
      %v616 = vld [vmem:[#allocation11 + $0x78] sm:$0xff]
      %v617 = vld [vmem:[%s7] sm:$0x1]
      %v619 = vperm.slane %v617, 0
      %621 = vmatpush.msra.mxu0 %v616
      %622 = vmatpush.msra.mxu0 %v615
      %623 = vmatpush.msra.mxu0 %v614
      %624 = vmatpush.msra.mxu0 %v613
      %625 = vmatpush.msra.mxu0 %v612
      %626 = vmatpush.msra.mxu0 %v611
      %627 = vmatpush.msra.mxu0 %v610
      %628 = vmatpush.msra.mxu0 %v609
      %629 = vmatpush.msra.mxu0 %v608
      %630 = vmatpush.msra.mxu0 %v607
      %631 = vmatpush.msra.mxu0 %v606
      %632 = vmatpush.msra.mxu0 %v605
      %633 = vmatpush.msra.mxu0 %v604
      %634 = vmatpush.msra.mxu0 %v603
      %635 = vmatpush.msra.mxu0 %v602
      %636 = vmatpush.msra.mxu0 %v601
      %637 = vmatmul.f32.gmra.mxu0 %v585
      %v638 = vpop.f32.mrf.mxu0
      %v639 = vadd.f32 %v619, %v638
      %640 = vmatmul.f32.gmra.mxu0 %v586
      %v641 = vpop.f32.mrf.mxu0
      %v642 = vadd.f32 %v619, %v641
      %643 = vmatmul.f32.gmra.mxu0 %v587
      %v644 = vpop.f32.mrf.mxu0
      %v645 = vadd.f32 %v619, %v644
      %646 = vmatmul.f32.gmra.mxu0 %v588
      %v647 = vpop.f32.mrf.mxu0
      %v648 = vadd.f32 %v619, %v647
      %649 = vmatmul.f32.gmra.mxu0 %v589
      %v650 = vpop.f32.mrf.mxu0
      %v651 = vadd.f32 %v619, %v650
      %652 = vmatmul.f32.gmra.mxu0 %v590
      %v653 = vpop.f32.mrf.mxu0
      %v654 = vadd.f32 %v619, %v653
      %655 = vmatmul.f32.gmra.mxu0 %v591
      %v656 = vpop.f32.mrf.mxu0
      %v657 = vadd.f32 %v619, %v656
      %658 = vmatmul.f32.gmra.mxu0 %v592
      %v659 = vpop.f32.mrf.mxu0
      %v660 = vadd.f32 %v619, %v659
      %661 = vmatmul.f32.gmra.mxu0 %v593
      %v662 = vpop.f32.mrf.mxu0
      %v663 = vadd.f32 %v619, %v662
      %664 = vmatmul.f32.gmra.mxu0 %v594
      %v665 = vpop.f32.mrf.mxu0
      %v666 = vadd.f32 %v619, %v665
      %667 = vmatmul.f32.gmra.mxu0 %v595
      %v668 = vpop.f32.mrf.mxu0
      %v669 = vadd.f32 %v619, %v668
      %670 = vmatmul.f32.gmra.mxu0 %v596
      %v671 = vpop.f32.mrf.mxu0
      %v672 = vadd.f32 %v619, %v671
      %673 = vmatmul.f32.gmra.mxu0 %v597
      %v674 = vpop.f32.mrf.mxu0
      %v675 = vadd.f32 %v619, %v674
      %676 = vmatmul.f32.gmra.mxu0 %v598
      %v677 = vpop.f32.mrf.mxu0
      %v678 = vadd.f32 %v619, %v677
      %679 = vmatmul.f32.gmra.mxu0 %v599
      %v680 = vpop.f32.mrf.mxu0
      %v681 = vadd.f32 %v619, %v680
      %682 = vmatmul.f32.gmra.mxu0 %v600
      %v683 = vpop.f32.mrf.mxu0
      %v684 = vadd.f32 %v619, %v683
      %685 = vdwg.mxu0
      %v686 = vmax.f32 %v639, 0.0
      %v687 = vmax.f32 %v642, 0.0
      %v688 = vmax.f32 %v645, 0.0
      %v689 = vmax.f32 %v648, 0.0
      %v690 = vmax.f32 %v651, 0.0
      %v691 = vmax.f32 %v654, 0.0
      %v692 = vmax.f32 %v657, 0.0
      %v693 = vmax.f32 %v660, 0.0
      %v694 = vmax.f32 %v663, 0.0
      %v695 = vmax.f32 %v666, 0.0
      %v696 = vmax.f32 %v669, 0.0
      %v697 = vmax.f32 %v672, 0.0
      %v698 = vmax.f32 %v675, 0.0
      %v699 = vmax.f32 %v678, 0.0
      %v700 = vmax.f32 %v681, 0.0
      %v701 = vmax.f32 %v684, 0.0
      %v702 = vld [vmem:[#allocation12] sm:$0xff]
      %v703 = vld [vmem:[#allocation12 + $0x8] sm:$0xff]
      %v704 = vld [vmem:[#allocation12 + $0x10] sm:$0xff]
      %v705 = vld [vmem:[#allocation12 + $0x18] sm:$0xff]
      %v706 = vld [vmem:[#allocation12 + $0x20] sm:$0xff]
      %v707 = vld [vmem:[#allocation12 + $0x28] sm:$0xff]
      %v708 = vld [vmem:[#allocation12 + $0x30] sm:$0xff]
      %v709 = vld [vmem:[#allocation12 + $0x38] sm:$0xff]
      %v710 = vld [vmem:[#allocation12 + $0x40] sm:$0xff]
      %v711 = vld [vmem:[#allocation12 + $0x48] sm:$0xff]
      %v712 = vld [vmem:[#allocation12 + $0x50] sm:$0xff]
      %v713 = vld [vmem:[#allocation12 + $0x58] sm:$0xff]
      %v714 = vld [vmem:[#allocation12 + $0x60] sm:$0xff]
      %v715 = vld [vmem:[#allocation12 + $0x68] sm:$0xff]
      %v716 = vld [vmem:[#allocation12 + $0x70] sm:$0xff]
      %v717 = vld [vmem:[#allocation12 + $0x78] sm:$0xff]
      %v718 = vld [vmem:[%s9] sm:$0x1]
      %v720 = vperm.slane %v718, 0
      %722 = vmatpush.msra.mxu0 %v717
      %723 = vmatpush.msra.mxu0 %v716
      %724 = vmatpush.msra.mxu0 %v715
      %725 = vmatpush.msra.mxu0 %v714
      %726 = vmatpush.msra.mxu0 %v713
      %727 = vmatpush.msra.mxu0 %v712
      %728 = vmatpush.msra.mxu0 %v711
      %729 = vmatpush.msra.mxu0 %v710
      %730 = vmatpush.msra.mxu0 %v709
      %731 = vmatpush.msra.mxu0 %v708
      %732 = vmatpush.msra.mxu0 %v707
      %733 = vmatpush.msra.mxu0 %v706
      %734 = vmatpush.msra.mxu0 %v705
      %735 = vmatpush.msra.mxu0 %v704
      %736 = vmatpush.msra.mxu0 %v703
      %737 = vmatpush.msra.mxu0 %v702
      %738 = vmatmul.f32.gmra.mxu0 %v686
      %v739 = vpop.f32.mrf.mxu0
      %v740 = vadd.f32 %v720, %v739
      %741 = vmatmul.f32.gmra.mxu0 %v687
      %v742 = vpop.f32.mrf.mxu0
      %v743 = vadd.f32 %v720, %v742
      %744 = vmatmul.f32.gmra.mxu0 %v688
      %v745 = vpop.f32.mrf.mxu0
      %v746 = vadd.f32 %v720, %v745
      %747 = vmatmul.f32.gmra.mxu0 %v689
      %v748 = vpop.f32.mrf.mxu0
      %v749 = vadd.f32 %v720, %v748
      %750 = vmatmul.f32.gmra.mxu0 %v690
      %v751 = vpop.f32.mrf.mxu0
      %v752 = vadd.f32 %v720, %v751
      %753 = vmatmul.f32.gmra.mxu0 %v691
      %v754 = vpop.f32.mrf.mxu0
      %v755 = vadd.f32 %v720, %v754
      %756 = vmatmul.f32.gmra.mxu0 %v692
      %v757 = vpop.f32.mrf.mxu0
      %v758 = vadd.f32 %v720, %v757
      %759 = vmatmul.f32.gmra.mxu0 %v693
      %v760 = vpop.f32.mrf.mxu0
      %v761 = vadd.f32 %v720, %v760
      %762 = vmatmul.f32.gmra.mxu0 %v694
      %v763 = vpop.f32.mrf.mxu0
      %v764 = vadd.f32 %v720, %v763
      %765 = vmatmul.f32.gmra.mxu0 %v695
      %v766 = vpop.f32.mrf.mxu0
      %v767 = vadd.f32 %v720, %v766
      %768 = vmatmul.f32.gmra.mxu0 %v696
      %v769 = vpop.f32.mrf.mxu0
      %v770 = vadd.f32 %v720, %v769
      %771 = vmatmul.f32.gmra.mxu0 %v697
      %v772 = vpop.f32.mrf.mxu0
      %v773 = vadd.f32 %v720, %v772
      %774 = vmatmul.f32.gmra.mxu0 %v698
      %v775 = vpop.f32.mrf.mxu0
      %v776 = vadd.f32 %v720, %v775
      %777 = vmatmul.f32.gmra.mxu0 %v699
      %v778 = vpop.f32.mrf.mxu0
      %v779 = vadd.f32 %v720, %v778
      %780 = vmatmul.f32.gmra.mxu0 %v700
      %v781 = vpop.f32.mrf.mxu0
      %v782 = vadd.f32 %v720, %v781
      %783 = vmatmul.f32.gmra.mxu0 %v701
      %v784 = vpop.f32.mrf.mxu0
      %v785 = vadd.f32 %v720, %v784
      %786 = vdwg.mxu0
      %787 = vst [vmem:[#allocation14] sm:$0xff] %v740
      %788 = vst [vmem:[#allocation14 + $0x8] sm:$0xff] %v743
      %789 = vst [vmem:[#allocation14 + $0x10] sm:$0xff] %v746
      %790 = vst [vmem:[#allocation14 + $0x18] sm:$0xff] %v749
      %791 = vst [vmem:[#allocation14 + $0x20] sm:$0xff] %v752
      %792 = vst [vmem:[#allocation14 + $0x28] sm:$0xff] %v755
      %793 = vst [vmem:[#allocation14 + $0x30] sm:$0xff] %v758
      %794 = vst [vmem:[#allocation14 + $0x38] sm:$0xff] %v761
      %795 = vst [vmem:[#allocation14 + $0x40] sm:$0xff] %v764
      %796 = vst [vmem:[#allocation14 + $0x48] sm:$0xff] %v767
      %797 = vst [vmem:[#allocation14 + $0x50] sm:$0xff] %v770
      %798 = vst [vmem:[#allocation14 + $0x58] sm:$0xff] %v773
      %799 = vst [vmem:[#allocation14 + $0x60] sm:$0xff] %v776
      %800 = vst [vmem:[#allocation14 + $0x68] sm:$0xff] %v779
      %801 = vst [vmem:[#allocation14 + $0x70] sm:$0xff] %v782
      %802 = vst [vmem:[#allocation14 + $0x78] sm:$0xff] %v785
    $region73: #{tpu_custom_call.1} parent=1 // pred_fallthru
      _
    // Predicated region
    $region74: #{tpu_custom_call.1} parent=1 // pred_check
      _
    $region75: #{tpu_custom_call.1} parent=1 // pred_check_branch
      %804 = sbr.rel (0) target = $region77
    $region76: #{tpu_custom_call.1} parent=1 // pred_region
      %806 = vsyncadd [#allocation5], 0
      %s807 = sshll.u32 [#allocation14], 4
      %s808 = int_to_ptr.vmem [resolvable:$true] %s807
      %s809 = sshll.u32 %s10, 4
      %s810 = int_to_ptr.hbm [resolvable:$true] %s809
      %815 = dma.vmem_to_hbm [thread:$0]  %s808, 2048, %s810, [#allocation5], 128, 128, 8
    $region77: #{tpu_custom_call.1} parent=1 // pred_fallthru
      _
    // Predicated region
    $region78: #{tpu_custom_call.1} parent=1 // pred_check
      _
    $region79: #{tpu_custom_call.1} parent=1 // pred_check_branch
      %817 = sbr.rel (0) target = $region81
    $region80: #{tpu_custom_call.1} parent=1 // pred_region
      %819 = dma.done [#allocation5], 2048
    $region81: #{tpu_custom_call.1} parent=1 // pred_fallthru
      _
    %820 = vsyncpa [#allocation4], 1
    %821 = vsyncpa [#allocation7], 1
    %822 = vsyncpa [#allocation10], 1
    %823 = vsyncpa [#allocation13], 1
    %824 = vsyncpa [#allocation5], 1

</llo_original>
